<compile_context>
chip_gen: v7x
topology: tpu7x:2x2x1
jax: 0.10.0
libtpu: 0.0.40
codegen_flags: <defaults>
</compile_context>

<pallas_src>
import functools

import jax
import jax.numpy as jnp
from jax.experimental import pallas as pl
from jax.experimental.pallas import tpu as pltpu


def _rnn_kernel(xf_ref, h0_ref, wih_ref, whh_ref, b_ref, wfc_ref, bfc_ref,
                out_ref, hfin_ref, *, T, B):
    # xf_ref:  (T*B, I)  time-major inputs, flattened over (step, batch)
    # h0_ref:  (B, H)    initial hidden
    # wih_ref: (I, H)    W_ih^T
    # whh_ref: (H, H)    W_hh^T
    # b_ref:   (1, H)    b_ih + b_hh (pre-summed)
    # wfc_ref: (H, 2)    W_fc^T
    # bfc_ref: (1, 2)
    # out_ref: (T, 2)    fc(last-batch-row hidden at each step)
    # hfin_ref:(B, H)    final hidden state

    # One batched MXU call for the whole input projection (all T steps).
    xp = (jnp.dot(xf_ref[...], wih_ref[...],
                  preferred_element_type=jnp.float32)
          + b_ref[...])                                  # (T*B, H)

    whh = whh_ref[...]                                   # (H, H), loaded once
    h = h0_ref[...].astype(jnp.float32)                  # carried in vregs

    rows = []
    # Static trip count -> fully unrolled straight-line recurrence.
    for t in range(T):
        xp_t = xp[t * B:(t + 1) * B, :]                  # (B, H) static slice
        h = jnp.tanh(xp_t + jnp.dot(h, whh,
                                    preferred_element_type=jnp.float32))
        rows.append(h[B - 1:B, :])                       # last batch row (1,H)

    hfin_ref[...] = h

    last_rows = jnp.concatenate(rows, axis=0)            # (T, H)
    out_ref[...] = (jnp.dot(last_rows, wfc_ref[...],
                            preferred_element_type=jnp.float32)
                    + bfc_ref[...])


def circle_rnn_forward(x, hidden, params):
    """x: (B, S, I) float32, hidden: (B, H) float32.  Requires S >= B."""
    B, S, I = x.shape
    H = params["w_hh"].shape[0]
    count = B                      # matches `count = len(x)` in PyTorch
    assert S >= count, "PyTorch code indexes x[:, idx] for idx < len(x)"

    # Time-major, then flatten (step, batch) so the kernel does one batched
    # input-projection matmul.
    x_flat = jnp.transpose(x[:, :count, :], (1, 0, 2)).reshape(count * B, I)
    wih_t = params["w_ih"].T                             # (I, H)
    whh_t = params["w_hh"].T                             # (H, H)
    b = (params["b_ih"] + params["b_hh"]).reshape(1, H)  # pre-summed bias
    wfc_t = params["w_fc"].T                             # (H, 2)
    bfc = params["b_fc"].reshape(1, 2)

    vmem = pl.BlockSpec(memory_space=pltpu.MemorySpace.VMEM)
    flops = 2 * (count * B * I * H + count * B * H * H + count * H * 2)
    bytes_accessed = 4 * (x_flat.size + hidden.size + wih_t.size + whh_t.size
                          + b.size + wfc_t.size + bfc.size
                          + count * 2 + B * H)
    out, h_final = pl.pallas_call(
        functools.partial(_rnn_kernel, T=count, B=B),
        out_shape=(
            jax.ShapeDtypeStruct((count, 2), jnp.float32),
            jax.ShapeDtypeStruct((B, H), jnp.float32),
        ),
        in_specs=[vmem] * 7,
        out_specs=(vmem, vmem),
        cost_estimate=pl.CostEstimate(
            flops=flops,
            transcendentals=count * B * H,
            bytes_accessed=bytes_accessed,
        ),
    )(x_flat, hidden, wih_t, whh_t, b, wfc_t, bfc)
    return out, h_final


def _reference_forward(x, hidden, params):
    """Pure-JAX mirror of the PyTorch forward, for verification."""
    count = x.shape[0]
    h = hidden
    hs = []
    for idx in range(count):
        h = jnp.tanh(x[:, idx] @ params["w_ih"].T + params["b_ih"]
                     + h @ params["w_hh"].T + params["b_hh"])
        hs.append(h)
    stacked = jnp.stack(hs)                 # (count, B, H)
    out = stacked[:, -1, :] @ params["w_fc"].T + params["b_fc"]
    return out, h


def init_params(key, input_size, hidden_size):
    """Deterministic init mimicking PyTorch's uniform(-1/sqrt(H), 1/sqrt(H))."""
    ks = jax.random.split(key, 6)
    bound = 1.0 / jnp.sqrt(jnp.float32(hidden_size))
    u = lambda k, shape: jax.random.uniform(k, shape, jnp.float32, -bound, bound)
    return {
        "w_ih": u(ks[0], (hidden_size, input_size)),
        "w_hh": u(ks[1], (hidden_size, hidden_size)),
        "b_ih": u(ks[2], (hidden_size,)),
        "b_hh": u(ks[3], (hidden_size,)),
        "w_fc": u(ks[4], (2, hidden_size)),
        "b_fc": u(ks[5], (2,)),
    }


if __name__ == "__main__":
    input_size = 16
    hidden_size = 32
    batch = 8        # == seq, since the PyTorch loop runs len(x) steps
    seq = 8

    key = jax.random.PRNGKey(0)
    kx, kh, kp = jax.random.split(key, 3)
    x = jax.random.normal(kx, (batch, seq, input_size), jnp.float32)
    hidden0 = jax.random.normal(kh, (batch, hidden_size), jnp.float32)
    params = init_params(kp, input_size, hidden_size)

    out, h_final = jax.jit(circle_rnn_forward)(x, hidden0, params)
    out = jax.block_until_ready(out)
    h_final = jax.block_until_ready(h_final)

    ref_out, ref_h = _reference_forward(x, hidden0, params)
    assert out.shape == (batch, 2) and h_final.shape == (batch, hidden_size)
    assert jnp.allclose(out, ref_out, atol=1e-5, rtol=1e-5)
    assert jnp.allclose(h_final, ref_h, atol=1e-5, rtol=1e-5)

    print("KERNEL_OK")
</pallas_src>

<mosaic_0001>
module attributes {stable_mosaic.version = 11 : i64} {
  func.func @_rnn_kernel(%arg0: memref<64x16xf32, #tpu.memory_space<vmem>>, %arg1: memref<8x32xf32, #tpu.memory_space<vmem>>, %arg2: memref<16x32xf32, #tpu.memory_space<vmem>>, %arg3: memref<32x32xf32, #tpu.memory_space<vmem>>, %arg4: memref<1x32xf32, #tpu.memory_space<vmem>>, %arg5: memref<32x2xf32, #tpu.memory_space<vmem>>, %arg6: memref<1x2xf32, #tpu.memory_space<vmem>>, %arg7: memref<8x2xf32, #tpu.memory_space<vmem>>, %arg8: memref<8x32xf32, #tpu.memory_space<vmem>>) attributes {dimension_semantics = [], scalar_prefetch = 0 : i64, scratch_operands = 0 : i64, tpu.core_type = #tpu.core_type<tc>} {
    %c0 = arith.constant 0 : index
    %c0_0 = arith.constant 0 : index
    %0 = vector.load %arg0[%c0, %c0_0] : memref<64x16xf32, #tpu.memory_space<vmem>>, vector<64x16xf32>
    %c0_1 = arith.constant 0 : index
    %c0_2 = arith.constant 0 : index
    %1 = vector.load %arg2[%c0_1, %c0_2] : memref<16x32xf32, #tpu.memory_space<vmem>>, vector<16x32xf32>
    %cst = arith.constant dense<0.000000e+00> : vector<64x32xf32>
    %2 = tpu.matmul %0, %1, %cst {dimension_numbers = #tpu.dot_dimension_numbers<[1], [0], [0], [1], [0, 0, 1, 1], [], []>} : vector<64x16xf32>, vector<16x32xf32>, vector<64x32xf32> -> vector<64x32xf32>
    %c0_3 = arith.constant 0 : index
    %c0_4 = arith.constant 0 : index
    %3 = vector.load %arg4[%c0_3, %c0_4] : memref<1x32xf32, #tpu.memory_space<vmem>>, vector<1x32xf32>
    %4 = vector.broadcast %3 : vector<1x32xf32> to vector<64x32xf32>
    %5 = arith.addf %2, %4 : vector<64x32xf32>
    %c0_5 = arith.constant 0 : index
    %c0_6 = arith.constant 0 : index
    %6 = vector.load %arg3[%c0_5, %c0_6] : memref<32x32xf32, #tpu.memory_space<vmem>>, vector<32x32xf32>
    %c0_7 = arith.constant 0 : index
    %c0_8 = arith.constant 0 : index
    %7 = vector.load %arg1[%c0_7, %c0_8] : memref<8x32xf32, #tpu.memory_space<vmem>>, vector<8x32xf32>
    %8 = vector.extract_strided_slice %5 {offsets = [0, 0], sizes = [8, 32], strides = [1, 1]} : vector<64x32xf32> to vector<8x32xf32>
    %cst_9 = arith.constant dense<0.000000e+00> : vector<8x32xf32>
    %9 = tpu.matmul %7, %6, %cst_9 {dimension_numbers = #tpu.dot_dimension_numbers<[1], [0], [0], [1], [0, 0, 1, 1], [], []>} : vector<8x32xf32>, vector<32x32xf32>, vector<8x32xf32> -> vector<8x32xf32>
    %10 = arith.addf %8, %9 : vector<8x32xf32>
    %11 = math.tanh %10 : vector<8x32xf32>
    %12 = vector.extract_strided_slice %11 {offsets = [7, 0], sizes = [1, 32], strides = [1, 1]} : vector<8x32xf32> to vector<1x32xf32>
    %13 = vector.extract_strided_slice %5 {offsets = [8, 0], sizes = [8, 32], strides = [1, 1]} : vector<64x32xf32> to vector<8x32xf32>
    %cst_10 = arith.constant dense<0.000000e+00> : vector<8x32xf32>
    %14 = tpu.matmul %11, %6, %cst_10 {dimension_numbers = #tpu.dot_dimension_numbers<[1], [0], [0], [1], [0, 0, 1, 1], [], []>} : vector<8x32xf32>, vector<32x32xf32>, vector<8x32xf32> -> vector<8x32xf32>
    %15 = arith.addf %13, %14 : vector<8x32xf32>
    %16 = math.tanh %15 : vector<8x32xf32>
    %17 = vector.extract_strided_slice %16 {offsets = [7, 0], sizes = [1, 32], strides = [1, 1]} : vector<8x32xf32> to vector<1x32xf32>
    %18 = vector.extract_strided_slice %5 {offsets = [16, 0], sizes = [8, 32], strides = [1, 1]} : vector<64x32xf32> to vector<8x32xf32>
    %cst_11 = arith.constant dense<0.000000e+00> : vector<8x32xf32>
    %19 = tpu.matmul %16, %6, %cst_11 {dimension_numbers = #tpu.dot_dimension_numbers<[1], [0], [0], [1], [0, 0, 1, 1], [], []>} : vector<8x32xf32>, vector<32x32xf32>, vector<8x32xf32> -> vector<8x32xf32>
    %20 = arith.addf %18, %19 : vector<8x32xf32>
    %21 = math.tanh %20 : vector<8x32xf32>
    %22 = vector.extract_strided_slice %21 {offsets = [7, 0], sizes = [1, 32], strides = [1, 1]} : vector<8x32xf32> to vector<1x32xf32>
    %23 = vector.extract_strided_slice %5 {offsets = [24, 0], sizes = [8, 32], strides = [1, 1]} : vector<64x32xf32> to vector<8x32xf32>
    %cst_12 = arith.constant dense<0.000000e+00> : vector<8x32xf32>
    %24 = tpu.matmul %21, %6, %cst_12 {dimension_numbers = #tpu.dot_dimension_numbers<[1], [0], [0], [1], [0, 0, 1, 1], [], []>} : vector<8x32xf32>, vector<32x32xf32>, vector<8x32xf32> -> vector<8x32xf32>
    %25 = arith.addf %23, %24 : vector<8x32xf32>
    %26 = math.tanh %25 : vector<8x32xf32>
    %27 = vector.extract_strided_slice %26 {offsets = [7, 0], sizes = [1, 32], strides = [1, 1]} : vector<8x32xf32> to vector<1x32xf32>
    %28 = vector.extract_strided_slice %5 {offsets = [32, 0], sizes = [8, 32], strides = [1, 1]} : vector<64x32xf32> to vector<8x32xf32>
    %cst_13 = arith.constant dense<0.000000e+00> : vector<8x32xf32>
    %29 = tpu.matmul %26, %6, %cst_13 {dimension_numbers = #tpu.dot_dimension_numbers<[1], [0], [0], [1], [0, 0, 1, 1], [], []>} : vector<8x32xf32>, vector<32x32xf32>, vector<8x32xf32> -> vector<8x32xf32>
    %30 = arith.addf %28, %29 : vector<8x32xf32>
    %31 = math.tanh %30 : vector<8x32xf32>
    %32 = vector.extract_strided_slice %31 {offsets = [7, 0], sizes = [1, 32], strides = [1, 1]} : vector<8x32xf32> to vector<1x32xf32>
    %33 = vector.extract_strided_slice %5 {offsets = [40, 0], sizes = [8, 32], strides = [1, 1]} : vector<64x32xf32> to vector<8x32xf32>
    %cst_14 = arith.constant dense<0.000000e+00> : vector<8x32xf32>
    %34 = tpu.matmul %31, %6, %cst_14 {dimension_numbers = #tpu.dot_dimension_numbers<[1], [0], [0], [1], [0, 0, 1, 1], [], []>} : vector<8x32xf32>, vector<32x32xf32>, vector<8x32xf32> -> vector<8x32xf32>
    %35 = arith.addf %33, %34 : vector<8x32xf32>
    %36 = math.tanh %35 : vector<8x32xf32>
    %37 = vector.extract_strided_slice %36 {offsets = [7, 0], sizes = [1, 32], strides = [1, 1]} : vector<8x32xf32> to vector<1x32xf32>
    %38 = vector.extract_strided_slice %5 {offsets = [48, 0], sizes = [8, 32], strides = [1, 1]} : vector<64x32xf32> to vector<8x32xf32>
    %cst_15 = arith.constant dense<0.000000e+00> : vector<8x32xf32>
    %39 = tpu.matmul %36, %6, %cst_15 {dimension_numbers = #tpu.dot_dimension_numbers<[1], [0], [0], [1], [0, 0, 1, 1], [], []>} : vector<8x32xf32>, vector<32x32xf32>, vector<8x32xf32> -> vector<8x32xf32>
    %40 = arith.addf %38, %39 : vector<8x32xf32>
    %41 = math.tanh %40 : vector<8x32xf32>
    %42 = vector.extract_strided_slice %41 {offsets = [7, 0], sizes = [1, 32], strides = [1, 1]} : vector<8x32xf32> to vector<1x32xf32>
    %43 = vector.extract_strided_slice %5 {offsets = [56, 0], sizes = [8, 32], strides = [1, 1]} : vector<64x32xf32> to vector<8x32xf32>
    %cst_16 = arith.constant dense<0.000000e+00> : vector<8x32xf32>
    %44 = tpu.matmul %41, %6, %cst_16 {dimension_numbers = #tpu.dot_dimension_numbers<[1], [0], [0], [1], [0, 0, 1, 1], [], []>} : vector<8x32xf32>, vector<32x32xf32>, vector<8x32xf32> -> vector<8x32xf32>
    %45 = arith.addf %43, %44 : vector<8x32xf32>
    %46 = math.tanh %45 : vector<8x32xf32>
    %47 = vector.extract_strided_slice %46 {offsets = [7, 0], sizes = [1, 32], strides = [1, 1]} : vector<8x32xf32> to vector<1x32xf32>
    %c0_17 = arith.constant 0 : index
    %c0_18 = arith.constant 0 : index
    %48 = vector.load %arg8[%c0_17, %c0_18] : memref<8x32xf32, #tpu.memory_space<vmem>>, vector<8x32xf32>
    tpu.vector_store %arg8[%c0_17, %c0_18], %46 {strides = array<i32>} : memref<8x32xf32, #tpu.memory_space<vmem>>, vector<8x32xf32>,
    %49 = tpu.concatenate %12, %17, %22, %27, %32, %37, %42, %47 in 0 : vector<1x32xf32>, vector<1x32xf32>, vector<1x32xf32>, vector<1x32xf32>, vector<1x32xf32>, vector<1x32xf32>, vector<1x32xf32>, vector<1x32xf32> -> vector<8x32xf32>
    %c0_19 = arith.constant 0 : index
    %c0_20 = arith.constant 0 : index
    %50 = vector.load %arg5[%c0_19, %c0_20] : memref<32x2xf32, #tpu.memory_space<vmem>>, vector<32x2xf32>
    %cst_21 = arith.constant dense<0.000000e+00> : vector<8x2xf32>
    %51 = tpu.matmul %49, %50, %cst_21 {dimension_numbers = #tpu.dot_dimension_numbers<[1], [0], [0], [1], [0, 0, 1, 1], [], []>} : vector<8x32xf32>, vector<32x2xf32>, vector<8x2xf32> -> vector<8x2xf32>
    %c0_22 = arith.constant 0 : index
    %c0_23 = arith.constant 0 : index
    %52 = vector.load %arg6[%c0_22, %c0_23] : memref<1x2xf32, #tpu.memory_space<vmem>>, vector<1x2xf32>
    %53 = vector.broadcast %52 : vector<1x2xf32> to vector<8x2xf32>
    %54 = arith.addf %51, %53 : vector<8x2xf32>
    %c0_24 = arith.constant 0 : index
    %c0_25 = arith.constant 0 : index
    %55 = vector.load %arg7[%c0_24, %c0_25] : memref<8x2xf32, #tpu.memory_space<vmem>>, vector<8x2xf32>
    tpu.vector_store %arg7[%c0_24, %c0_25], %54 {strides = array<i32>} : memref<8x2xf32, #tpu.memory_space<vmem>>, vector<8x2xf32>,
    return
  }
}

</mosaic_0001>

<llo_original>
// kernel: circle_rnn_forward.1
$region0: #{circle_rnn_forward.1}
  #allocation0 [shape = 'u32[]', space=smem, size = 0x4, offset = 0x4, fixed_abs, tag = 'smem constant byte address 0x4 - core index']
  #allocation1 [shape = 'u32[144,128]{1,0:T(1,128)}', space=vmem, size = 0x12000, scoped, tag = 'internal scratch']
  %s0 = inlined_call_operand.vmem [shape: f32[64,16], index: 0, kind: input, shape index: {}]
  %s1 = inlined_call_operand.vmem [shape: f32[8,32], index: 1, kind: input, shape index: {}]
  %s2 = inlined_call_operand.vmem [shape: f32[16,32], index: 2, kind: input, shape index: {}]
  %s3 = inlined_call_operand.vmem [shape: f32[32,32], index: 3, kind: input, shape index: {}]
  %s4 = inlined_call_operand.vmem [shape: f32[1,32], index: 4, kind: input, shape index: {}]
  %s5 = inlined_call_operand.vmem [shape: f32[32,2], index: 5, kind: input, shape index: {}]
  %s6 = inlined_call_operand.vmem [shape: f32[1,2], index: 6, kind: input, shape index: {}]
  %s7 = inlined_call_operand.vmem [shape: f32[8,2], index: 7, kind: output, shape index: {0}]
  %s8 = inlined_call_operand.hbm [shape: f32[8,32], index: 8, kind: output, shape index: {1}]
  %9 = xla_tuple %s7, %s8
  %s10 = sld [smem:[#allocation0]]
  $region46: #{circle_rnn_forward.1} parent=0
    _
  %s12 = ssub.s32 1, %s10
  %s13 = scalar_select 0, %s12, %s10
  $region1: #{circle_rnn_forward.1} parent=0
    #allocation2 [shape = 'u8[4096]{0}', space=vmem, size = 0x1000, scoped, tag = 'output window, operand 1, single buffered']
    #allocation3 [shape = 's32[1]{0}', space=sflag, size = 0x4, scoped, tag = 'scoped memory for circle_rnn_forward.1']
    %14 = vsyncpa [#allocation3], 0
    // Predicated region
    $region2: #{circle_rnn_forward.1} parent=1 // pred_check
      _
    $region3: #{circle_rnn_forward.1} parent=1 // pred_check_branch
      %16 = sbr.rel (0) target = $region5
    $region4: #{circle_rnn_forward.1} parent=1 // pred_region
      _
    $region5: #{circle_rnn_forward.1} parent=1 // pred_fallthru
      _
    // Predicated region
    $region6: #{circle_rnn_forward.1} parent=1 // pred_check
      _
    $region7: #{circle_rnn_forward.1} parent=1 // pred_check_branch
      %18 = sbr.rel (0) target = $region9
    $region8: #{circle_rnn_forward.1} parent=1 // pred_region
      _
    $region9: #{circle_rnn_forward.1} parent=1 // pred_fallthru
      _
    // Predicated region
    $region10: #{circle_rnn_forward.1} parent=1 // pred_check
      _
    $region11: #{circle_rnn_forward.1} parent=1 // pred_check_branch
      %20 = sbr.rel (0) target = $region13
    $region12: #{circle_rnn_forward.1} parent=1 // pred_region
      _
    $region13: #{circle_rnn_forward.1} parent=1 // pred_fallthru
      _
    // Predicated region
    $region14: #{circle_rnn_forward.1} parent=1 // pred_check
      _
    $region15: #{circle_rnn_forward.1} parent=1 // pred_check_branch
      %22 = sbr.rel (0) target = $region17
    $region16: #{circle_rnn_forward.1} parent=1 // pred_region
      _
    $region17: #{circle_rnn_forward.1} parent=1 // pred_fallthru
      _
    // Predicated region
    $region18: #{circle_rnn_forward.1} parent=1 // pred_check
      _
    $region19: #{circle_rnn_forward.1} parent=1 // pred_check_branch
      %24 = sbr.rel (0) target = $region21
    $region20: #{circle_rnn_forward.1} parent=1 // pred_region
      _
    $region21: #{circle_rnn_forward.1} parent=1 // pred_fallthru
      _
    // Predicated region
    $region22: #{circle_rnn_forward.1} parent=1 // pred_check
      _
    $region23: #{circle_rnn_forward.1} parent=1 // pred_check_branch
      %26 = sbr.rel (0) target = $region25
    $region24: #{circle_rnn_forward.1} parent=1 // pred_region
      _
    $region25: #{circle_rnn_forward.1} parent=1 // pred_fallthru
      _
    // Predicated region
    $region26: #{circle_rnn_forward.1} parent=1 // pred_check
      _
    $region27: #{circle_rnn_forward.1} parent=1 // pred_check_branch
      %28 = sbr.rel (0) target = $region29
    $region28: #{circle_rnn_forward.1} parent=1 // pred_region
      _
    $region29: #{circle_rnn_forward.1} parent=1 // pred_fallthru
      _
    %v29 = vld [vmem:[%s0] sm:$0xff]
    %v30 = vld [vmem:[%s0 + $0x8] sm:$0xff]
    %v31 = vld [vmem:[%s0 + $0x10] sm:$0xff]
    %v32 = vld [vmem:[%s0 + $0x18] sm:$0xff]
    %v33 = vld [vmem:[%s0 + $0x20] sm:$0xff]
    %v34 = vld [vmem:[%s0 + $0x28] sm:$0xff]
    %v35 = vld [vmem:[%s0 + $0x30] sm:$0xff]
    %v36 = vld [vmem:[%s0 + $0x38] sm:$0xff]
    %v37 = vld [vmem:[%s2] sm:$0xff]
    %v38 = vld [vmem:[%s2 + $0x8] sm:$0xff]
    %v39 = vld [vmem:[%s4] sm:$0x1]
    %v41 = vlaneseq
    %v42 = vshrl.u32 %v41, 7
    %v43 = vsub.s32 0, %v42
    %v44 = vrot.slane %v39, %v43
    %vm46 = vcmask 130048
    %v48 = vsel %vm46, %v29, 0
    %v51 = vsel %vm46, %v30, 0
    %v54 = vsel %vm46, %v31, 0
    %v57 = vsel %vm46, %v32, 0
    %v60 = vsel %vm46, %v33, 0
    %v63 = vsel %vm46, %v34, 0
    %v66 = vsel %vm46, %v35, 0
    %v69 = vsel %vm46, %v36, 0
    %71 = vmatprep.subr.mxu0 0.0
    %72 = vmatpush1.msra.mxu0 %v37
    %73 = vmatprep.subr.mxu0 0.0
    %74 = vmatpush1.msra.mxu0 %v38
    %75 = vmatprep.subr.mxu0 0.0
    %76 = vmatpush1.msra.mxu0 0.0
    %77 = vmatprep.subr.mxu0 0.0
    %78 = vmatpush1.msra.mxu0 0.0
    %79 = vmatprep.subr.mxu0 0.0
    %80 = vmatpush1.msra.mxu0 0.0
    %81 = vmatprep.subr.mxu0 0.0
    %82 = vmatpush1.msra.mxu0 0.0
    %83 = vmatprep.subr.mxu0 0.0
    %84 = vmatpush1.msra.mxu0 0.0
    %85 = vmatprep.subr.mxu0 0.0
    %86 = vmatpush1.msra.mxu0 0.0
    %87 = vmatprep.subr.mxu0 0.0
    %88 = vmatpush1.msra.mxu0 0.0
    %89 = vmatprep.subr.mxu0 0.0
    %90 = vmatpush1.msra.mxu0 0.0
    %91 = vmatprep.subr.mxu0 0.0
    %92 = vmatpush1.msra.mxu0 0.0
    %93 = vmatprep.subr.mxu0 0.0
    %94 = vmatpush1.msra.mxu0 0.0
    %95 = vmatprep.subr.mxu0 0.0
    %96 = vmatpush1.msra.mxu0 0.0
    %97 = vmatprep.subr.mxu0 0.0
    %98 = vmatpush1.msra.mxu0 0.0
    %99 = vmatprep.subr.mxu0 0.0
    %100 = vmatpush1.msra.mxu0 0.0
    %101 = vmatprep.subr.mxu0 0.0
    %102 = vmatpush1.msra.mxu0 0.0
    %103 = vmatprep.subr.mxu0 0.0
    %104 = vmatpush1.msra.mxu0 0.0
    %105 = vmatprep.subr.mxu0 0.0
    %106 = vmatpush1.msra.mxu0 0.0
    %107 = vmatprep.subr.mxu0 0.0
    %108 = vmatpush1.msra.mxu0 0.0
    %109 = vmatprep.subr.mxu0 0.0
    %110 = vmatpush1.msra.mxu0 0.0
    %111 = vmatprep.subr.mxu0 0.0
    %112 = vmatpush1.msra.mxu0 0.0
    %113 = vmatprep.subr.mxu0 0.0
    %114 = vmatpush1.msra.mxu0 0.0
    %115 = vmatprep.subr.mxu0 0.0
    %116 = vmatpush1.msra.mxu0 0.0
    %117 = vmatprep.subr.mxu0 0.0
    %118 = vmatpush1.msra.mxu0 0.0
    %119 = vmatprep.subr.mxu0 0.0
    %120 = vmatpush1.msra.mxu0 0.0
    %121 = vmatprep.subr.mxu0 0.0
    %122 = vmatpush1.msra.mxu0 0.0
    %123 = vmatprep.subr.mxu0 0.0
    %124 = vmatpush1.msra.mxu0 0.0
    %125 = vmatprep.subr.mxu0 0.0
    %126 = vmatpush1.msra.mxu0 0.0
    %127 = vmatprep.subr.mxu0 0.0
    %128 = vmatpush1.msra.mxu0 0.0
    %129 = vmatprep.subr.mxu0 0.0
    %130 = vmatpush1.msra.mxu0 0.0
    %131 = vmatprep.subr.mxu0 0.0
    %132 = vmatpush1.msra.mxu0 0.0
    %133 = vmatprep.subr.mxu0 0.0
    %134 = vmatpush1.msra.mxu0 0.0
    %135 = vmatprep.mubr.f32.mxu0 0.0
    %136 = vmatmul.mubr.f32.gmra.mrb[0].mxu0 %v48
    %v137 = vpop.f32.mrb[0].mxu0
    %v138 = vadd.f32 %v44, %v137
    %v139 = vpop.f32.mrb[0].mxu0
    %140 = vmatprep.mubr.f32.mxu0 0.0
    %141 = vmatmul.mubr.f32.gmra.mrb[0].mxu0 %v51
    %v142 = vpop.f32.mrb[0].mxu0
    %v143 = vadd.f32 %v44, %v142
    %v144 = vpop.f32.mrb[0].mxu0
    %145 = vmatprep.mubr.f32.mxu0 0.0
    %146 = vmatmul.mubr.f32.gmra.mrb[0].mxu0 %v54
    %v147 = vpop.f32.mrb[0].mxu0
    %v148 = vadd.f32 %v44, %v147
    %v149 = vpop.f32.mrb[0].mxu0
    %150 = vmatprep.mubr.f32.mxu0 0.0
    %151 = vmatmul.mubr.f32.gmra.mrb[0].mxu0 %v57
    %v152 = vpop.f32.mrb[0].mxu0
    %v153 = vadd.f32 %v44, %v152
    %v154 = vpop.f32.mrb[0].mxu0
    %155 = vmatprep.mubr.f32.mxu0 0.0
    %156 = vmatmul.mubr.f32.gmra.mrb[0].mxu0 %v60
    %v157 = vpop.f32.mrb[0].mxu0
    %v158 = vadd.f32 %v44, %v157
    %v159 = vpop.f32.mrb[0].mxu0
    %160 = vmatprep.mubr.f32.mxu0 0.0
    %161 = vmatmul.mubr.f32.gmra.mrb[0].mxu0 %v63
    %v162 = vpop.f32.mrb[0].mxu0
    %v163 = vadd.f32 %v44, %v162
    %v164 = vpop.f32.mrb[0].mxu0
    %165 = vmatprep.mubr.f32.mxu0 0.0
    %166 = vmatmul.mubr.f32.gmra.mrb[0].mxu0 %v66
    %v167 = vpop.f32.mrb[0].mxu0
    %v168 = vadd.f32 %v44, %v167
    %v169 = vpop.f32.mrb[0].mxu0
    %170 = vmatprep.mubr.f32.mxu0 0.0
    %171 = vmatmul.mubr.f32.gmra.mrb[0].mxu0 %v69
    %v172 = vpop.f32.mrb[0].mxu0
    %v173 = vadd.f32 %v44, %v172
    %v174 = vpop.f32.mrb[0].mxu0
    %175 = vdwg.mxu0
    %v176 = vld [vmem:[%s3] sm:$0xff]
    %v177 = vld [vmem:[%s3 + $0x8] sm:$0xff]
    %v178 = vld [vmem:[%s3 + $0x10] sm:$0xff]
    %v179 = vld [vmem:[%s3 + $0x18] sm:$0xff]
    %v180 = vld [vmem:[%s1] sm:$0xff]
    %vm181 = vcmask 261120
    %v183 = vsel %vm181, %v180, 0
    %185 = vmatprep.subr.mxu0 0.0
    %186 = vmatpush1.msra.mxu0 %v176
    %187 = vmatprep.subr.mxu0 0.0
    %188 = vmatpush1.msra.mxu0 %v177
    %189 = vmatprep.subr.mxu0 0.0
    %190 = vmatpush1.msra.mxu0 %v178
    %191 = vmatprep.subr.mxu0 0.0
    %192 = vmatpush1.msra.mxu0 %v179
    %193 = vmatprep.subr.mxu0 0.0
    %194 = vmatpush1.msra.mxu0 0.0
    %195 = vmatprep.subr.mxu0 0.0
    %196 = vmatpush1.msra.mxu0 0.0
    %197 = vmatprep.subr.mxu0 0.0
    %198 = vmatpush1.msra.mxu0 0.0
    %199 = vmatprep.subr.mxu0 0.0
    %200 = vmatpush1.msra.mxu0 0.0
    %201 = vmatprep.subr.mxu0 0.0
    %202 = vmatpush1.msra.mxu0 0.0
    %203 = vmatprep.subr.mxu0 0.0
    %204 = vmatpush1.msra.mxu0 0.0
    %205 = vmatprep.subr.mxu0 0.0
    %206 = vmatpush1.msra.mxu0 0.0
    %207 = vmatprep.subr.mxu0 0.0
    %208 = vmatpush1.msra.mxu0 0.0
    %209 = vmatprep.subr.mxu0 0.0
    %210 = vmatpush1.msra.mxu0 0.0
    %211 = vmatprep.subr.mxu0 0.0
    %212 = vmatpush1.msra.mxu0 0.0
    %213 = vmatprep.subr.mxu0 0.0
    %214 = vmatpush1.msra.mxu0 0.0
    %215 = vmatprep.subr.mxu0 0.0
    %216 = vmatpush1.msra.mxu0 0.0
    %217 = vmatprep.subr.mxu0 0.0
    %218 = vmatpush1.msra.mxu0 0.0
    %219 = vmatprep.subr.mxu0 0.0
    %220 = vmatpush1.msra.mxu0 0.0
    %221 = vmatprep.subr.mxu0 0.0
    %222 = vmatpush1.msra.mxu0 0.0
    %223 = vmatprep.subr.mxu0 0.0
    %224 = vmatpush1.msra.mxu0 0.0
    %225 = vmatprep.subr.mxu0 0.0
    %226 = vmatpush1.msra.mxu0 0.0
    %227 = vmatprep.subr.mxu0 0.0
    %228 = vmatpush1.msra.mxu0 0.0
    %229 = vmatprep.subr.mxu0 0.0
    %230 = vmatpush1.msra.mxu0 0.0
    %231 = vmatprep.subr.mxu0 0.0
    %232 = vmatpush1.msra.mxu0 0.0
    %233 = vmatprep.subr.mxu0 0.0
    %234 = vmatpush1.msra.mxu0 0.0
    %235 = vmatprep.subr.mxu0 0.0
    %236 = vmatpush1.msra.mxu0 0.0
    %237 = vmatprep.subr.mxu0 0.0
    %238 = vmatpush1.msra.mxu0 0.0
    %239 = vmatprep.subr.mxu0 0.0
    %240 = vmatpush1.msra.mxu0 0.0
    %241 = vmatprep.subr.mxu0 0.0
    %242 = vmatpush1.msra.mxu0 0.0
    %243 = vmatprep.subr.mxu0 0.0
    %244 = vmatpush1.msra.mxu0 0.0
    %245 = vmatprep.subr.mxu0 0.0
    %246 = vmatpush1.msra.mxu0 0.0
    %247 = vmatprep.subr.mxu0 0.0
    %248 = vmatpush1.msra.mxu0 0.0
    %249 = vmatprep.mubr.f32.mxu0 0.0
    %250 = vmatmul.mubr.f32.gmra.mrb[0].mxu0 %v183
    %v251 = vpop.f32.mrb[0].mxu0
    %v252 = vadd.f32 0.0, %v251
    %v253 = vpop.f32.mrb[0].mxu0
    %254 = vdwg.mxu0
    %v255 = vadd.f32 %v138, %v252
    %v256 = vtanh.pop %v255
    %v258 = vsel %vm181, %v256, 0
    %260 = vmatprep.subr.mxu0 0.0
    %261 = vmatpush1.msra.mxu0 %v176
    %262 = vmatprep.subr.mxu0 0.0
    %263 = vmatpush1.msra.mxu0 %v177
    %264 = vmatprep.subr.mxu0 0.0
    %265 = vmatpush1.msra.mxu0 %v178
    %266 = vmatprep.subr.mxu0 0.0
    %267 = vmatpush1.msra.mxu0 %v179
    %268 = vmatprep.subr.mxu0 0.0
    %269 = vmatpush1.msra.mxu0 0.0
    %270 = vmatprep.subr.mxu0 0.0
    %271 = vmatpush1.msra.mxu0 0.0
    %272 = vmatprep.subr.mxu0 0.0
    %273 = vmatpush1.msra.mxu0 0.0
    %274 = vmatprep.subr.mxu0 0.0
    %275 = vmatpush1.msra.mxu0 0.0
    %276 = vmatprep.subr.mxu0 0.0
    %277 = vmatpush1.msra.mxu0 0.0
    %278 = vmatprep.subr.mxu0 0.0
    %279 = vmatpush1.msra.mxu0 0.0
    %280 = vmatprep.subr.mxu0 0.0
    %281 = vmatpush1.msra.mxu0 0.0
    %282 = vmatprep.subr.mxu0 0.0
    %283 = vmatpush1.msra.mxu0 0.0
    %284 = vmatprep.subr.mxu0 0.0
    %285 = vmatpush1.msra.mxu0 0.0
    %286 = vmatprep.subr.mxu0 0.0
    %287 = vmatpush1.msra.mxu0 0.0
    %288 = vmatprep.subr.mxu0 0.0
    %289 = vmatpush1.msra.mxu0 0.0
    %290 = vmatprep.subr.mxu0 0.0
    %291 = vmatpush1.msra.mxu0 0.0
    %292 = vmatprep.subr.mxu0 0.0
    %293 = vmatpush1.msra.mxu0 0.0
    %294 = vmatprep.subr.mxu0 0.0
    %295 = vmatpush1.msra.mxu0 0.0
    %296 = vmatprep.subr.mxu0 0.0
    %297 = vmatpush1.msra.mxu0 0.0
    %298 = vmatprep.subr.mxu0 0.0
    %299 = vmatpush1.msra.mxu0 0.0
    %300 = vmatprep.subr.mxu0 0.0
    %301 = vmatpush1.msra.mxu0 0.0
    %302 = vmatprep.subr.mxu0 0.0
    %303 = vmatpush1.msra.mxu0 0.0
    %304 = vmatprep.subr.mxu0 0.0
    %305 = vmatpush1.msra.mxu0 0.0
    %306 = vmatprep.subr.mxu0 0.0
    %307 = vmatpush1.msra.mxu0 0.0
    %308 = vmatprep.subr.mxu0 0.0
    %309 = vmatpush1.msra.mxu0 0.0
    %310 = vmatprep.subr.mxu0 0.0
    %311 = vmatpush1.msra.mxu0 0.0
    %312 = vmatprep.subr.mxu0 0.0
    %313 = vmatpush1.msra.mxu0 0.0
    %314 = vmatprep.subr.mxu0 0.0
    %315 = vmatpush1.msra.mxu0 0.0
    %316 = vmatprep.subr.mxu0 0.0
    %317 = vmatpush1.msra.mxu0 0.0
    %318 = vmatprep.subr.mxu0 0.0
    %319 = vmatpush1.msra.mxu0 0.0
    %320 = vmatprep.subr.mxu0 0.0
    %321 = vmatpush1.msra.mxu0 0.0
    %322 = vmatprep.subr.mxu0 0.0
    %323 = vmatpush1.msra.mxu0 0.0
    %324 = vmatprep.mubr.f32.mxu0 0.0
    %325 = vmatmul.mubr.f32.gmra.mrb[0].mxu0 %v258
    %v326 = vpop.f32.mrb[0].mxu0
    %v327 = vadd.f32 0.0, %v326
    %v328 = vpop.f32.mrb[0].mxu0
    %329 = vdwg.mxu0
    %v330 = vadd.f32 %v143, %v327
    %v331 = vtanh.pop %v330
    %v333 = vsel %vm181, %v331, 0
    %335 = vmatprep.subr.mxu0 0.0
    %336 = vmatpush1.msra.mxu0 %v176
    %337 = vmatprep.subr.mxu0 0.0
    %338 = vmatpush1.msra.mxu0 %v177
    %339 = vmatprep.subr.mxu0 0.0
    %340 = vmatpush1.msra.mxu0 %v178
    %341 = vmatprep.subr.mxu0 0.0
    %342 = vmatpush1.msra.mxu0 %v179
    %343 = vmatprep.subr.mxu0 0.0
    %344 = vmatpush1.msra.mxu0 0.0
    %345 = vmatprep.subr.mxu0 0.0
    %346 = vmatpush1.msra.mxu0 0.0
    %347 = vmatprep.subr.mxu0 0.0
    %348 = vmatpush1.msra.mxu0 0.0
    %349 = vmatprep.subr.mxu0 0.0
    %350 = vmatpush1.msra.mxu0 0.0
    %351 = vmatprep.subr.mxu0 0.0
    %352 = vmatpush1.msra.mxu0 0.0
    %353 = vmatprep.subr.mxu0 0.0
    %354 = vmatpush1.msra.mxu0 0.0
    %355 = vmatprep.subr.mxu0 0.0
    %356 = vmatpush1.msra.mxu0 0.0
    %357 = vmatprep.subr.mxu0 0.0
    %358 = vmatpush1.msra.mxu0 0.0
    %359 = vmatprep.subr.mxu0 0.0
    %360 = vmatpush1.msra.mxu0 0.0
    %361 = vmatprep.subr.mxu0 0.0
    %362 = vmatpush1.msra.mxu0 0.0
    %363 = vmatprep.subr.mxu0 0.0
    %364 = vmatpush1.msra.mxu0 0.0
    %365 = vmatprep.subr.mxu0 0.0
    %366 = vmatpush1.msra.mxu0 0.0
    %367 = vmatprep.subr.mxu0 0.0
    %368 = vmatpush1.msra.mxu0 0.0
    %369 = vmatprep.subr.mxu0 0.0
    %370 = vmatpush1.msra.mxu0 0.0
    %371 = vmatprep.subr.mxu0 0.0
    %372 = vmatpush1.msra.mxu0 0.0
    %373 = vmatprep.subr.mxu0 0.0
    %374 = vmatpush1.msra.mxu0 0.0
    %375 = vmatprep.subr.mxu0 0.0
    %376 = vmatpush1.msra.mxu0 0.0
    %377 = vmatprep.subr.mxu0 0.0
    %378 = vmatpush1.msra.mxu0 0.0
    %379 = vmatprep.subr.mxu0 0.0
    %380 = vmatpush1.msra.mxu0 0.0
    %381 = vmatprep.subr.mxu0 0.0
    %382 = vmatpush1.msra.mxu0 0.0
    %383 = vmatprep.subr.mxu0 0.0
    %384 = vmatpush1.msra.mxu0 0.0
    %385 = vmatprep.subr.mxu0 0.0
    %386 = vmatpush1.msra.mxu0 0.0
    %387 = vmatprep.subr.mxu0 0.0
    %388 = vmatpush1.msra.mxu0 0.0
    %389 = vmatprep.subr.mxu0 0.0
    %390 = vmatpush1.msra.mxu0 0.0
    %391 = vmatprep.subr.mxu0 0.0
    %392 = vmatpush1.msra.mxu0 0.0
    %393 = vmatprep.subr.mxu0 0.0
    %394 = vmatpush1.msra.mxu0 0.0
    %395 = vmatprep.subr.mxu0 0.0
    %396 = vmatpush1.msra.mxu0 0.0
    %397 = vmatprep.subr.mxu0 0.0
    %398 = vmatpush1.msra.mxu0 0.0
    %399 = vmatprep.mubr.f32.mxu0 0.0
    %400 = vmatmul.mubr.f32.gmra.mrb[0].mxu0 %v333
    %v401 = vpop.f32.mrb[0].mxu0
    %v402 = vadd.f32 0.0, %v401
    %v403 = vpop.f32.mrb[0].mxu0
    %404 = vdwg.mxu0
    %v405 = vadd.f32 %v148, %v402
    %v406 = vtanh.pop %v405
    %v408 = vsel %vm181, %v406, 0
    %410 = vmatprep.subr.mxu0 0.0
    %411 = vmatpush1.msra.mxu0 %v176
    %412 = vmatprep.subr.mxu0 0.0
    %413 = vmatpush1.msra.mxu0 %v177
    %414 = vmatprep.subr.mxu0 0.0
    %415 = vmatpush1.msra.mxu0 %v178
    %416 = vmatprep.subr.mxu0 0.0
    %417 = vmatpush1.msra.mxu0 %v179
    %418 = vmatprep.subr.mxu0 0.0
    %419 = vmatpush1.msra.mxu0 0.0
    %420 = vmatprep.subr.mxu0 0.0
    %421 = vmatpush1.msra.mxu0 0.0
    %422 = vmatprep.subr.mxu0 0.0
    %423 = vmatpush1.msra.mxu0 0.0
    %424 = vmatprep.subr.mxu0 0.0
    %425 = vmatpush1.msra.mxu0 0.0
    %426 = vmatprep.subr.mxu0 0.0
    %427 = vmatpush1.msra.mxu0 0.0
    %428 = vmatprep.subr.mxu0 0.0
    %429 = vmatpush1.msra.mxu0 0.0
    %430 = vmatprep.subr.mxu0 0.0
    %431 = vmatpush1.msra.mxu0 0.0
    %432 = vmatprep.subr.mxu0 0.0
    %433 = vmatpush1.msra.mxu0 0.0
    %434 = vmatprep.subr.mxu0 0.0
    %435 = vmatpush1.msra.mxu0 0.0
    %436 = vmatprep.subr.mxu0 0.0
    %437 = vmatpush1.msra.mxu0 0.0
    %438 = vmatprep.subr.mxu0 0.0
    %439 = vmatpush1.msra.mxu0 0.0
    %440 = vmatprep.subr.mxu0 0.0
    %441 = vmatpush1.msra.mxu0 0.0
    %442 = vmatprep.subr.mxu0 0.0
    %443 = vmatpush1.msra.mxu0 0.0
    %444 = vmatprep.subr.mxu0 0.0
    %445 = vmatpush1.msra.mxu0 0.0
    %446 = vmatprep.subr.mxu0 0.0
    %447 = vmatpush1.msra.mxu0 0.0
    %448 = vmatprep.subr.mxu0 0.0
    %449 = vmatpush1.msra.mxu0 0.0
    %450 = vmatprep.subr.mxu0 0.0
    %451 = vmatpush1.msra.mxu0 0.0
    %452 = vmatprep.subr.mxu0 0.0
    %453 = vmatpush1.msra.mxu0 0.0
    %454 = vmatprep.subr.mxu0 0.0
    %455 = vmatpush1.msra.mxu0 0.0
    %456 = vmatprep.subr.mxu0 0.0
    %457 = vmatpush1.msra.mxu0 0.0
    %458 = vmatprep.subr.mxu0 0.0
    %459 = vmatpush1.msra.mxu0 0.0
    %460 = vmatprep.subr.mxu0 0.0
    %461 = vmatpush1.msra.mxu0 0.0
    %462 = vmatprep.subr.mxu0 0.0
    %463 = vmatpush1.msra.mxu0 0.0
    %464 = vmatprep.subr.mxu0 0.0
    %465 = vmatpush1.msra.mxu0 0.0
    %466 = vmatprep.subr.mxu0 0.0
    %467 = vmatpush1.msra.mxu0 0.0
    %468 = vmatprep.subr.mxu0 0.0
    %469 = vmatpush1.msra.mxu0 0.0
    %470 = vmatprep.subr.mxu0 0.0
    %471 = vmatpush1.msra.mxu0 0.0
    %472 = vmatprep.subr.mxu0 0.0
    %473 = vmatpush1.msra.mxu0 0.0
    %474 = vmatprep.mubr.f32.mxu0 0.0
    %475 = vmatmul.mubr.f32.gmra.mrb[0].mxu0 %v408
    %v476 = vpop.f32.mrb[0].mxu0
    %v477 = vadd.f32 0.0, %v476
    %v478 = vpop.f32.mrb[0].mxu0
    %479 = vdwg.mxu0
    %v480 = vadd.f32 %v153, %v477
    %v481 = vtanh.pop %v480
    %v483 = vsel %vm181, %v481, 0
    %485 = vmatprep.subr.mxu0 0.0
    %486 = vmatpush1.msra.mxu0 %v176
    %487 = vmatprep.subr.mxu0 0.0
    %488 = vmatpush1.msra.mxu0 %v177
    %489 = vmatprep.subr.mxu0 0.0
    %490 = vmatpush1.msra.mxu0 %v178
    %491 = vmatprep.subr.mxu0 0.0
    %492 = vmatpush1.msra.mxu0 %v179
    %493 = vmatprep.subr.mxu0 0.0
    %494 = vmatpush1.msra.mxu0 0.0
    %495 = vmatprep.subr.mxu0 0.0
    %496 = vmatpush1.msra.mxu0 0.0
    %497 = vmatprep.subr.mxu0 0.0
    %498 = vmatpush1.msra.mxu0 0.0
    %499 = vmatprep.subr.mxu0 0.0
    %500 = vmatpush1.msra.mxu0 0.0
    %501 = vmatprep.subr.mxu0 0.0
    %502 = vmatpush1.msra.mxu0 0.0
    %503 = vmatprep.subr.mxu0 0.0
    %504 = vmatpush1.msra.mxu0 0.0
    %505 = vmatprep.subr.mxu0 0.0
    %506 = vmatpush1.msra.mxu0 0.0
    %507 = vmatprep.subr.mxu0 0.0
    %508 = vmatpush1.msra.mxu0 0.0
    %509 = vmatprep.subr.mxu0 0.0
    %510 = vmatpush1.msra.mxu0 0.0
    %511 = vmatprep.subr.mxu0 0.0
    %512 = vmatpush1.msra.mxu0 0.0
    %513 = vmatprep.subr.mxu0 0.0
    %514 = vmatpush1.msra.mxu0 0.0
    %515 = vmatprep.subr.mxu0 0.0
    %516 = vmatpush1.msra.mxu0 0.0
    %517 = vmatprep.subr.mxu0 0.0
    %518 = vmatpush1.msra.mxu0 0.0
    %519 = vmatprep.subr.mxu0 0.0
    %520 = vmatpush1.msra.mxu0 0.0
    %521 = vmatprep.subr.mxu0 0.0
    %522 = vmatpush1.msra.mxu0 0.0
    %523 = vmatprep.subr.mxu0 0.0
    %524 = vmatpush1.msra.mxu0 0.0
    %525 = vmatprep.subr.mxu0 0.0
    %526 = vmatpush1.msra.mxu0 0.0
    %527 = vmatprep.subr.mxu0 0.0
    %528 = vmatpush1.msra.mxu0 0.0
    %529 = vmatprep.subr.mxu0 0.0
    %530 = vmatpush1.msra.mxu0 0.0
    %531 = vmatprep.subr.mxu0 0.0
    %532 = vmatpush1.msra.mxu0 0.0
    %533 = vmatprep.subr.mxu0 0.0
    %534 = vmatpush1.msra.mxu0 0.0
    %535 = vmatprep.subr.mxu0 0.0
    %536 = vmatpush1.msra.mxu0 0.0
    %537 = vmatprep.subr.mxu0 0.0
    %538 = vmatpush1.msra.mxu0 0.0
    %539 = vmatprep.subr.mxu0 0.0
    %540 = vmatpush1.msra.mxu0 0.0
    %541 = vmatprep.subr.mxu0 0.0
    %542 = vmatpush1.msra.mxu0 0.0
    %543 = vmatprep.subr.mxu0 0.0
    %544 = vmatpush1.msra.mxu0 0.0
    %545 = vmatprep.subr.mxu0 0.0
    %546 = vmatpush1.msra.mxu0 0.0
    %547 = vmatprep.subr.mxu0 0.0
    %548 = vmatpush1.msra.mxu0 0.0
    %549 = vmatprep.mubr.f32.mxu0 0.0
    %550 = vmatmul.mubr.f32.gmra.mrb[0].mxu0 %v483
    %v551 = vpop.f32.mrb[0].mxu0
    %v552 = vadd.f32 0.0, %v551
    %v553 = vpop.f32.mrb[0].mxu0
    %554 = vdwg.mxu0
    %v555 = vadd.f32 %v158, %v552
    %v556 = vtanh.pop %v555
    %v558 = vsel %vm181, %v556, 0
    %560 = vmatprep.subr.mxu0 0.0
    %561 = vmatpush1.msra.mxu0 %v176
    %562 = vmatprep.subr.mxu0 0.0
    %563 = vmatpush1.msra.mxu0 %v177
    %564 = vmatprep.subr.mxu0 0.0
    %565 = vmatpush1.msra.mxu0 %v178
    %566 = vmatprep.subr.mxu0 0.0
    %567 = vmatpush1.msra.mxu0 %v179
    %568 = vmatprep.subr.mxu0 0.0
    %569 = vmatpush1.msra.mxu0 0.0
    %570 = vmatprep.subr.mxu0 0.0
    %571 = vmatpush1.msra.mxu0 0.0
    %572 = vmatprep.subr.mxu0 0.0
    %573 = vmatpush1.msra.mxu0 0.0
    %574 = vmatprep.subr.mxu0 0.0
    %575 = vmatpush1.msra.mxu0 0.0
    %576 = vmatprep.subr.mxu0 0.0
    %577 = vmatpush1.msra.mxu0 0.0
    %578 = vmatprep.subr.mxu0 0.0
    %579 = vmatpush1.msra.mxu0 0.0
    %580 = vmatprep.subr.mxu0 0.0
    %581 = vmatpush1.msra.mxu0 0.0
    %582 = vmatprep.subr.mxu0 0.0
    %583 = vmatpush1.msra.mxu0 0.0
    %584 = vmatprep.subr.mxu0 0.0
    %585 = vmatpush1.msra.mxu0 0.0
    %586 = vmatprep.subr.mxu0 0.0
    %587 = vmatpush1.msra.mxu0 0.0
    %588 = vmatprep.subr.mxu0 0.0
    %589 = vmatpush1.msra.mxu0 0.0
    %590 = vmatprep.subr.mxu0 0.0
    %591 = vmatpush1.msra.mxu0 0.0
    %592 = vmatprep.subr.mxu0 0.0
    %593 = vmatpush1.msra.mxu0 0.0
    %594 = vmatprep.subr.mxu0 0.0
    %595 = vmatpush1.msra.mxu0 0.0
    %596 = vmatprep.subr.mxu0 0.0
    %597 = vmatpush1.msra.mxu0 0.0
    %598 = vmatprep.subr.mxu0 0.0
    %599 = vmatpush1.msra.mxu0 0.0
    %600 = vmatprep.subr.mxu0 0.0
    %601 = vmatpush1.msra.mxu0 0.0
    %602 = vmatprep.subr.mxu0 0.0
    %603 = vmatpush1.msra.mxu0 0.0
    %604 = vmatprep.subr.mxu0 0.0
    %605 = vmatpush1.msra.mxu0 0.0
    %606 = vmatprep.subr.mxu0 0.0
    %607 = vmatpush1.msra.mxu0 0.0
    %608 = vmatprep.subr.mxu0 0.0
    %609 = vmatpush1.msra.mxu0 0.0
    %610 = vmatprep.subr.mxu0 0.0
    %611 = vmatpush1.msra.mxu0 0.0
    %612 = vmatprep.subr.mxu0 0.0
    %613 = vmatpush1.msra.mxu0 0.0
    %614 = vmatprep.subr.mxu0 0.0
    %615 = vmatpush1.msra.mxu0 0.0
    %616 = vmatprep.subr.mxu0 0.0
    %617 = vmatpush1.msra.mxu0 0.0
    %618 = vmatprep.subr.mxu0 0.0
    %619 = vmatpush1.msra.mxu0 0.0
    %620 = vmatprep.subr.mxu0 0.0
    %621 = vmatpush1.msra.mxu0 0.0
    %622 = vmatprep.subr.mxu0 0.0
    %623 = vmatpush1.msra.mxu0 0.0
    %624 = vmatprep.mubr.f32.mxu0 0.0
    %625 = vmatmul.mubr.f32.gmra.mrb[0].mxu0 %v558
    %v626 = vpop.f32.mrb[0].mxu0
    %v627 = vadd.f32 0.0, %v626
    %v628 = vpop.f32.mrb[0].mxu0
    %629 = vdwg.mxu0
    %v630 = vadd.f32 %v163, %v627
    %v631 = vtanh.pop %v630
    %v633 = vsel %vm181, %v631, 0
    %635 = vmatprep.subr.mxu0 0.0
    %636 = vmatpush1.msra.mxu0 %v176
    %637 = vmatprep.subr.mxu0 0.0
    %638 = vmatpush1.msra.mxu0 %v177
    %639 = vmatprep.subr.mxu0 0.0
    %640 = vmatpush1.msra.mxu0 %v178
    %641 = vmatprep.subr.mxu0 0.0
    %642 = vmatpush1.msra.mxu0 %v179
    %643 = vmatprep.subr.mxu0 0.0
    %644 = vmatpush1.msra.mxu0 0.0
    %645 = vmatprep.subr.mxu0 0.0
    %646 = vmatpush1.msra.mxu0 0.0
    %647 = vmatprep.subr.mxu0 0.0
    %648 = vmatpush1.msra.mxu0 0.0
    %649 = vmatprep.subr.mxu0 0.0
    %650 = vmatpush1.msra.mxu0 0.0
    %651 = vmatprep.subr.mxu0 0.0
    %652 = vmatpush1.msra.mxu0 0.0
    %653 = vmatprep.subr.mxu0 0.0
    %654 = vmatpush1.msra.mxu0 0.0
    %655 = vmatprep.subr.mxu0 0.0
    %656 = vmatpush1.msra.mxu0 0.0
    %657 = vmatprep.subr.mxu0 0.0
    %658 = vmatpush1.msra.mxu0 0.0
    %659 = vmatprep.subr.mxu0 0.0
    %660 = vmatpush1.msra.mxu0 0.0
    %661 = vmatprep.subr.mxu0 0.0
    %662 = vmatpush1.msra.mxu0 0.0
    %663 = vmatprep.subr.mxu0 0.0
    %664 = vmatpush1.msra.mxu0 0.0
    %665 = vmatprep.subr.mxu0 0.0
    %666 = vmatpush1.msra.mxu0 0.0
    %667 = vmatprep.subr.mxu0 0.0
    %668 = vmatpush1.msra.mxu0 0.0
    %669 = vmatprep.subr.mxu0 0.0
    %670 = vmatpush1.msra.mxu0 0.0
    %671 = vmatprep.subr.mxu0 0.0
    %672 = vmatpush1.msra.mxu0 0.0
    %673 = vmatprep.subr.mxu0 0.0
    %674 = vmatpush1.msra.mxu0 0.0
    %675 = vmatprep.subr.mxu0 0.0
    %676 = vmatpush1.msra.mxu0 0.0
    %677 = vmatprep.subr.mxu0 0.0
    %678 = vmatpush1.msra.mxu0 0.0
    %679 = vmatprep.subr.mxu0 0.0
    %680 = vmatpush1.msra.mxu0 0.0
    %681 = vmatprep.subr.mxu0 0.0
    %682 = vmatpush1.msra.mxu0 0.0
    %683 = vmatprep.subr.mxu0 0.0
    %684 = vmatpush1.msra.mxu0 0.0
    %685 = vmatprep.subr.mxu0 0.0
    %686 = vmatpush1.msra.mxu0 0.0
    %687 = vmatprep.subr.mxu0 0.0
    %688 = vmatpush1.msra.mxu0 0.0
    %689 = vmatprep.subr.mxu0 0.0
    %690 = vmatpush1.msra.mxu0 0.0
    %691 = vmatprep.subr.mxu0 0.0
    %692 = vmatpush1.msra.mxu0 0.0
    %693 = vmatprep.subr.mxu0 0.0
    %694 = vmatpush1.msra.mxu0 0.0
    %695 = vmatprep.subr.mxu0 0.0
    %696 = vmatpush1.msra.mxu0 0.0
    %697 = vmatprep.subr.mxu0 0.0
    %698 = vmatpush1.msra.mxu0 0.0
    %699 = vmatprep.mubr.f32.mxu0 0.0
    %700 = vmatmul.mubr.f32.gmra.mrb[0].mxu0 %v633
    %v701 = vpop.f32.mrb[0].mxu0
    %v702 = vadd.f32 0.0, %v701
    %v703 = vpop.f32.mrb[0].mxu0
    %704 = vdwg.mxu0
    %v705 = vadd.f32 %v168, %v702
    %v706 = vtanh.pop %v705
    %v708 = vsel %vm181, %v706, 0
    %710 = vmatprep.subr.mxu0 0.0
    %711 = vmatpush1.msra.mxu0 %v176
    %712 = vmatprep.subr.mxu0 0.0
    %713 = vmatpush1.msra.mxu0 %v177
    %714 = vmatprep.subr.mxu0 0.0
    %715 = vmatpush1.msra.mxu0 %v178
    %716 = vmatprep.subr.mxu0 0.0
    %717 = vmatpush1.msra.mxu0 %v179
    %718 = vmatprep.subr.mxu0 0.0
    %719 = vmatpush1.msra.mxu0 0.0
    %720 = vmatprep.subr.mxu0 0.0
    %721 = vmatpush1.msra.mxu0 0.0
    %722 = vmatprep.subr.mxu0 0.0
    %723 = vmatpush1.msra.mxu0 0.0
    %724 = vmatprep.subr.mxu0 0.0
    %725 = vmatpush1.msra.mxu0 0.0
    %726 = vmatprep.subr.mxu0 0.0
    %727 = vmatpush1.msra.mxu0 0.0
    %728 = vmatprep.subr.mxu0 0.0
    %729 = vmatpush1.msra.mxu0 0.0
    %730 = vmatprep.subr.mxu0 0.0
    %731 = vmatpush1.msra.mxu0 0.0
    %732 = vmatprep.subr.mxu0 0.0
    %733 = vmatpush1.msra.mxu0 0.0
    %734 = vmatprep.subr.mxu0 0.0
    %735 = vmatpush1.msra.mxu0 0.0
    %736 = vmatprep.subr.mxu0 0.0
    %737 = vmatpush1.msra.mxu0 0.0
    %738 = vmatprep.subr.mxu0 0.0
    %739 = vmatpush1.msra.mxu0 0.0
    %740 = vmatprep.subr.mxu0 0.0
    %741 = vmatpush1.msra.mxu0 0.0
    %742 = vmatprep.subr.mxu0 0.0
    %743 = vmatpush1.msra.mxu0 0.0
    %744 = vmatprep.subr.mxu0 0.0
    %745 = vmatpush1.msra.mxu0 0.0
    %746 = vmatprep.subr.mxu0 0.0
    %747 = vmatpush1.msra.mxu0 0.0
    %748 = vmatprep.subr.mxu0 0.0
    %749 = vmatpush1.msra.mxu0 0.0
    %750 = vmatprep.subr.mxu0 0.0
    %751 = vmatpush1.msra.mxu0 0.0
    %752 = vmatprep.subr.mxu0 0.0
    %753 = vmatpush1.msra.mxu0 0.0
    %754 = vmatprep.subr.mxu0 0.0
    %755 = vmatpush1.msra.mxu0 0.0
    %756 = vmatprep.subr.mxu0 0.0
    %757 = vmatpush1.msra.mxu0 0.0
    %758 = vmatprep.subr.mxu0 0.0
    %759 = vmatpush1.msra.mxu0 0.0
    %760 = vmatprep.subr.mxu0 0.0
    %761 = vmatpush1.msra.mxu0 0.0
    %762 = vmatprep.subr.mxu0 0.0
    %763 = vmatpush1.msra.mxu0 0.0
    %764 = vmatprep.subr.mxu0 0.0
    %765 = vmatpush1.msra.mxu0 0.0
    %766 = vmatprep.subr.mxu0 0.0
    %767 = vmatpush1.msra.mxu0 0.0
    %768 = vmatprep.subr.mxu0 0.0
    %769 = vmatpush1.msra.mxu0 0.0
    %770 = vmatprep.subr.mxu0 0.0
    %771 = vmatpush1.msra.mxu0 0.0
    %772 = vmatprep.subr.mxu0 0.0
    %773 = vmatpush1.msra.mxu0 0.0
    %774 = vmatprep.mubr.f32.mxu0 0.0
    %775 = vmatmul.mubr.f32.gmra.mrb[0].mxu0 %v708
    %v776 = vpop.f32.mrb[0].mxu0
    %v777 = vadd.f32 0.0, %v776
    %v778 = vpop.f32.mrb[0].mxu0
    %779 = vdwg.mxu0
    %v780 = vadd.f32 %v173, %v777
    %v781 = vtanh.pop %v780
    %782 = vst.msk [vmem:[#allocation2] sm:$0xff] %vm181, %v781
    %v783 = vrot.slane %v256, 7
    %v785 = vrot.slane %v331, 6
    %v787 = vrot.slane %v406, 5
    %v789 = vrot.slane %v481, 4
    %v791 = vrot.slane %v556, 3
    %v793 = vrot.slane %v631, 2
    %v795 = vrot.slane %v706, 1
    %vm797 = vcmask 1040384
    %v798 = vsel %vm797, %v783, %v785
    %vm799 = vcmask 1041408
    %v800 = vsel %vm799, %v798, %v787
    %vm801 = vcmask 1042432
    %v802 = vsel %vm801, %v800, %v789
    %vm803 = vcmask 1043456
    %v804 = vsel %vm803, %v802, %v791
    %vm805 = vcmask 1044480
    %v806 = vsel %vm805, %v804, %v793
    %vm807 = vcmask 1045504
    %v808 = vsel %vm807, %v806, %v795
    %vm809 = vcmask 1046528
    %v810 = vsel %vm809, %v808, %v781
    %v811 = vld [vmem:[%s5] sm:$0xff]
    %v812 = vld [vmem:[%s5 + $0x8] sm:$0xff]
    %v813 = vld [vmem:[%s5 + $0x10] sm:$0xff]
    %v814 = vld [vmem:[%s5 + $0x18] sm:$0xff]
    %v815 = vld [vmem:[%s6] sm:$0x1]
    %v817 = vlaneseq
    %v818 = vshrl.u32 %v817, 7
    %v819 = vsub.s32 0, %v818
    %v820 = vrot.slane %v815, %v819
    %v823 = vsel %vm181, %v810, 0
    %825 = vmatprep.subr.mxu0 0.0
    %826 = vmatpush1.msra.mxu0 %v811
    %827 = vmatprep.subr.mxu0 0.0
    %828 = vmatpush1.msra.mxu0 %v812
    %829 = vmatprep.subr.mxu0 0.0
    %830 = vmatpush1.msra.mxu0 %v813
    %831 = vmatprep.subr.mxu0 0.0
    %832 = vmatpush1.msra.mxu0 %v814
    %833 = vmatprep.subr.mxu0 0.0
    %834 = vmatpush1.msra.mxu0 0.0
    %835 = vmatprep.subr.mxu0 0.0
    %836 = vmatpush1.msra.mxu0 0.0
    %837 = vmatprep.subr.mxu0 0.0
    %838 = vmatpush1.msra.mxu0 0.0
    %839 = vmatprep.subr.mxu0 0.0
    %840 = vmatpush1.msra.mxu0 0.0
    %841 = vmatprep.subr.mxu0 0.0
    %842 = vmatpush1.msra.mxu0 0.0
    %843 = vmatprep.subr.mxu0 0.0
    %844 = vmatpush1.msra.mxu0 0.0
    %845 = vmatprep.subr.mxu0 0.0
    %846 = vmatpush1.msra.mxu0 0.0
    %847 = vmatprep.subr.mxu0 0.0
    %848 = vmatpush1.msra.mxu0 0.0
    %849 = vmatprep.subr.mxu0 0.0
    %850 = vmatpush1.msra.mxu0 0.0
    %851 = vmatprep.subr.mxu0 0.0
    %852 = vmatpush1.msra.mxu0 0.0
    %853 = vmatprep.subr.mxu0 0.0
    %854 = vmatpush1.msra.mxu0 0.0
    %855 = vmatprep.subr.mxu0 0.0
    %856 = vmatpush1.msra.mxu0 0.0
    %857 = vmatprep.subr.mxu0 0.0
    %858 = vmatpush1.msra.mxu0 0.0
    %859 = vmatprep.subr.mxu0 0.0
    %860 = vmatpush1.msra.mxu0 0.0
    %861 = vmatprep.subr.mxu0 0.0
    %862 = vmatpush1.msra.mxu0 0.0
    %863 = vmatprep.subr.mxu0 0.0
    %864 = vmatpush1.msra.mxu0 0.0
    %865 = vmatprep.subr.mxu0 0.0
    %866 = vmatpush1.msra.mxu0 0.0
    %867 = vmatprep.subr.mxu0 0.0
    %868 = vmatpush1.msra.mxu0 0.0
    %869 = vmatprep.subr.mxu0 0.0
    %870 = vmatpush1.msra.mxu0 0.0
    %871 = vmatprep.subr.mxu0 0.0
    %872 = vmatpush1.msra.mxu0 0.0
    %873 = vmatprep.subr.mxu0 0.0
    %874 = vmatpush1.msra.mxu0 0.0
    %875 = vmatprep.subr.mxu0 0.0
    %876 = vmatpush1.msra.mxu0 0.0
    %877 = vmatprep.subr.mxu0 0.0
    %878 = vmatpush1.msra.mxu0 0.0
    %879 = vmatprep.subr.mxu0 0.0
    %880 = vmatpush1.msra.mxu0 0.0
    %881 = vmatprep.subr.mxu0 0.0
    %882 = vmatpush1.msra.mxu0 0.0
    %883 = vmatprep.subr.mxu0 0.0
    %884 = vmatpush1.msra.mxu0 0.0
    %885 = vmatprep.subr.mxu0 0.0
    %886 = vmatpush1.msra.mxu0 0.0
    %887 = vmatprep.subr.mxu0 0.0
    %888 = vmatpush1.msra.mxu0 0.0
    %889 = vmatprep.mubr.f32.mxu0 0.0
    %890 = vmatmul.mubr.f32.gmra.mrb[0].mxu0 %v823
    %v891 = vpop.f32.mrb[0].mxu0
    %v892 = vadd.f32 %v820, %v891
    %v893 = vpop.f32.mrb[0].mxu0
    %894 = vdwg.mxu0
    %vm895 = vcmask 15360
    %896 = vst.msk [vmem:[%s7] sm:$0xff] %vm895, %v892
    // Predicated region
    $region30: #{circle_rnn_forward.1} parent=1 // pred_check
      _
    $region31: #{circle_rnn_forward.1} parent=1 // pred_check_branch
      %898 = sbr.rel (0) target = $region33
    $region32: #{circle_rnn_forward.1} parent=1 // pred_region
      _
    $region33: #{circle_rnn_forward.1} parent=1 // pred_fallthru
      _
    // Predicated region
    $region34: #{circle_rnn_forward.1} parent=1 // pred_check
      _
    $region35: #{circle_rnn_forward.1} parent=1 // pred_check_branch
      %900 = sbr.rel (0) target = $region37
    $region36: #{circle_rnn_forward.1} parent=1 // pred_region
      %s902 = ssub.s32 128, 128
      %903 = vsyncadd [#allocation3], %s902
      %s905 = sshll.u32 [#allocation2], 4
      %s906 = int_to_ptr.vmem [resolvable:$true] %s905
      %908 = dma.vmem_to_hbm [thread:$0]  %s906, 128, %s8, [#allocation3]
    $region37: #{circle_rnn_forward.1} parent=1 // pred_fallthru
      _
    // Predicated region
    $region38: #{circle_rnn_forward.1} parent=1 // pred_check
      _
    $region39: #{circle_rnn_forward.1} parent=1 // pred_check_branch
      %910 = sbr.rel (0) target = $region41
    $region40: #{circle_rnn_forward.1} parent=1 // pred_region
      _
    $region41: #{circle_rnn_forward.1} parent=1 // pred_fallthru
      _
    // Predicated region
    $region42: #{circle_rnn_forward.1} parent=1 // pred_check
      _
    $region43: #{circle_rnn_forward.1} parent=1 // pred_check_branch
      %912 = sbr.rel (0) target = $region45
    $region44: #{circle_rnn_forward.1} parent=1 // pred_region
      %913 = dma.done [#allocation3], 128
    $region45: #{circle_rnn_forward.1} parent=1 // pred_fallthru
      _
    %914 = vsyncpa [#allocation3], 1

</llo_original>
